<compile_context>
chip_gen: v6e
topology: v6e:2x2x1
jax: 0.10.0
libtpu: 0.0.40
codegen_flags: <defaults>
</compile_context>

<pallas_src>
import functools

import jax
import jax.numpy as jnp
from jax.experimental import pallas as pl
from jax.experimental.pallas import tpu as pltpu


# ---------------------------------------------------------------------------
# Pass 1: pooling + squeeze branches
# ---------------------------------------------------------------------------
def _pool_branch_kernel(x_ref, w_ref, b_ref,          # inputs
                        cse_ref, sse_ref, tse_ref,    # outputs (gates)
                        s_acc, t_acc, pc_acc,         # VMEM scratch
                        *, hid, tile_c, inv_d, inv_hw, inv_dhw):
    ct = pl.program_id(1)
    n_ct = pl.num_programs(1)

    @pl.when(ct == 0)
    def _init():
        s_acc[...] = jnp.zeros_like(s_acc)
        t_acc[...] = jnp.zeros_like(t_acc)

    x = x_ref[0].astype(jnp.float32)                  # (tc, D, HW)

    # Partial pools for this channel tile (raw sums; scaled at the end).
    part_t = jnp.sum(x, axis=2)                       # (tc, D)   sum over HW
    part_s = jnp.sum(x, axis=1)                       # (tc, HW)  sum over D

    # Rows of the packed weights for this tile: [w1^T | w2 | b2 | ws | wt].
    row0 = ct * tile_c
    if tile_c % 8 == 0:
        row0 = pl.multiple_of(row0, 8)
    w_rows = w_ref[pl.ds(row0, tile_c), :]            # (tc, 2*hid+3)
    ws_col = w_rows[:, 2 * hid + 1:2 * hid + 2]       # (tc, 1)
    wt_col = w_rows[:, 2 * hid + 2:2 * hid + 3]       # (tc, 1)

    # sSE / tSE 1x1x1 convs == channel-weighted sums; accumulate over C tiles.
    s_acc[...] += jnp.sum(ws_col * part_s, axis=0, keepdims=True)   # (1, HW)
    t_acc[...] += jnp.sum(wt_col * part_t, axis=0, keepdims=True)   # (1, D)

    # pool_c derived from the HW partial sums (no extra full reduction pass).
    pc_acc[pl.ds(row0, tile_c), :] = (
        jnp.sum(part_t, axis=1, keepdims=True) * inv_dhw)           # (tc, 1)

    @pl.when(ct == n_ct - 1)
    def _finalize():
        wf = w_ref[...]                               # (C, 2*hid+3)
        w1t = wf[:, 0:hid]                            # (C, hid)
        w2 = wf[:, hid:2 * hid]                       # (C, hid)
        b2_col = wf[:, 2 * hid:2 * hid + 1]           # (C, 1)
        bv = b_ref[...]                               # (1, hid+2)
        b1_row = bv[:, 0:hid]                         # (1, hid)
        bs = bv[:, hid:hid + 1]                       # (1, 1)
        bt = bv[:, hid + 1:hid + 2]                   # (1, 1)

        # cSE: two 1x1x1 convs on the global average (tiny; done on the VPU).
        pc = pc_acc[...]                                              # (C, 1)
        z1 = jnp.sum(w1t * pc, axis=0, keepdims=True) + b1_row        # (1, hid)
        z1 = jnp.maximum(z1, 0.0)
        z2 = jnp.sum(w2 * z1, axis=1, keepdims=True) + b2_col         # (C, 1)
        cse_ref[0] = jax.nn.sigmoid(jax.nn.sigmoid(z2))

        # sSE / tSE gates (double sigmoid, as in the module's forward()).
        s = s_acc[...] * inv_d + bs                                   # (1, HW)
        sse_ref[0] = jax.nn.sigmoid(jax.nn.sigmoid(s))
        t = t_acc[...] * inv_hw + bt                                  # (1, D)
        tse_ref[0] = jax.nn.sigmoid(jax.nn.sigmoid(t))


# ---------------------------------------------------------------------------
# Pass 2: excite / combine on the lane-dense flattened layout
# ---------------------------------------------------------------------------
def _excite_kernel(x_ref, cse_ref, plane_ref, o_ref):
    # plane already holds (sSE + tSE + 1) for this spatial tile; cse is a
    # per-channel column -> out = x * (cSE + sSE + tSE + 1): 1 add + 1 mul.
    o_ref[0] = (x_ref[0] * (cse_ref[0] + plane_ref[0])).astype(o_ref.dtype)


# ---------------------------------------------------------------------------
# Tiling / compiler-parameter helpers
# ---------------------------------------------------------------------------
def _pick_spatial_tile(s):
    for t in (2048, 1024, 512, 256, 128):
        if s % t == 0:
            return t
    return s   # fall back to the full (possibly non-128-multiple) extent


def _pick_channel_tile(c, per_channel_bytes, budget_bytes):
    best = None
    d = 8
    while d <= c:
        if c % d == 0 and d * per_channel_bytes <= budget_bytes:
            best = d
        d += 8
    return best if best is not None else c


def _vmem_limit(block_bytes):
    # Generous double-buffering estimate, clamped to a range that is valid on
    # every TPU generation (v7x has only 64 MiB of physical VMEM).
    return int(min(max(4 * block_bytes + (8 << 20), 32 << 20), 56 << 20))


# ---------------------------------------------------------------------------
# Forward wrapper
# ---------------------------------------------------------------------------
def tscse_forward(x, params, reduction, *, tile_c1=None, tile_c2=None,
                  tile_s=None):
    """TSCSE forward. x: (B, C, D, H, W), NCDHW as in the PyTorch module."""
    B, C, D, H, W = x.shape
    HW = H * W
    S = D * HW
    hid = C // reduction
    f32 = jnp.float32

    # ---- pack the 1x1x1-conv weights into two small arrays ----------------
    w1t = params["w1"].reshape(hid, C).T.astype(f32)            # (C, hid)
    w2 = params["w2"].reshape(C, hid).astype(f32)               # (C, hid)
    b2 = params["b2"].reshape(C, 1).astype(f32)
    ws = params["ws"].reshape(C, 1).astype(f32)
    wt = params["wt"].reshape(C, 1).astype(f32)
    pack_w = jnp.concatenate([w1t, w2, b2, ws, wt], axis=1)     # (C, 2*hid+3)
    pack_b = jnp.concatenate([params["b1"].reshape(1, hid),
                              params["bs"].reshape(1, 1),
                              params["bt"].reshape(1, 1)],
                             axis=1).astype(f32)                # (1, hid+2)

    # ---- tiling ------------------------------------------------------------
    if tile_s is None:
        tile_s = _pick_spatial_tile(S)
    if tile_c1 is None:
        tile_c1 = _pick_channel_tile(C, D * HW * 8, 16 << 20)
    if tile_c2 is None:
        tile_c2 = _pick_channel_tile(C, tile_s * 16, 8 << 20)
    assert C % tile_c1 == 0 and C % tile_c2 == 0 and S % tile_s == 0

    x4 = x.reshape(B, C, D, HW)   # pooling layout: (D, HW) in the vreg tile
    x3 = x.reshape(B, C, S)       # lane-dense excite layout (S = D*HW)

    # ---- pass 1: pools + squeeze branches ----------------------------------
    kern1 = functools.partial(
        _pool_branch_kernel, hid=hid, tile_c=tile_c1,
        inv_d=1.0 / D, inv_hw=1.0 / HW, inv_dhw=1.0 / (D * HW))
    cse, sse, tse = pl.pallas_call(
        kern1,
        out_shape=(jax.ShapeDtypeStruct((B, C, 1), f32),
                   jax.ShapeDtypeStruct((B, 1, HW), f32),
                   jax.ShapeDtypeStruct((B, 1, D), f32)),
        grid_spec=pltpu.PrefetchScalarGridSpec(
            num_scalar_prefetch=0,
            grid=(B, C // tile_c1),
            in_specs=[
                pl.BlockSpec((1, tile_c1, D, HW), lambda b, c: (b, c, 0, 0)),
                pl.BlockSpec((C, 2 * hid + 3), lambda b, c: (0, 0)),
                pl.BlockSpec((1, hid + 2), lambda b, c: (0, 0)),
            ],
            out_specs=(
                pl.BlockSpec((1, C, 1), lambda b, c: (b, 0, 0)),
                pl.BlockSpec((1, 1, HW), lambda b, c: (b, 0, 0)),
                pl.BlockSpec((1, 1, D), lambda b, c: (b, 0, 0)),
            ),
            scratch_shapes=[pltpu.VMEM((1, HW), f32),
                            pltpu.VMEM((1, D), f32),
                            pltpu.VMEM((C, 1), f32)],
        ),
        compiler_params=pltpu.CompilerParams(
            dimension_semantics=("parallel", "arbitrary"),
            vmem_limit_bytes=_vmem_limit(tile_c1 * D * HW * 4)),
    )(x4, pack_w, pack_b)

    # Tiny broadcast combine of the two 1-D gates into one lane-dense plane
    # (sSE + tSE + 1) in the flattened excite layout.  Negligible vs. the main
    # volume; keeps pass 2 at 1 add + 1 mul per element.
    plane = (tse[:, :, :, None] + sse[:, :, None, :] + 1.0).reshape(B, 1, S)

    # ---- pass 2: excite / combine ------------------------------------------
    out3 = pl.pallas_call(
        _excite_kernel,
        out_shape=jax.ShapeDtypeStruct((B, C, S), x.dtype),
        grid_spec=pltpu.PrefetchScalarGridSpec(
            num_scalar_prefetch=0,
            grid=(B, C // tile_c2, S // tile_s),
            in_specs=[
                pl.BlockSpec((1, tile_c2, tile_s), lambda b, c, s: (b, c, s)),
                pl.BlockSpec((1, tile_c2, 1), lambda b, c, s: (b, c, 0)),
                pl.BlockSpec((1, 1, tile_s), lambda b, c, s: (b, 0, s)),
            ],
            out_specs=pl.BlockSpec((1, tile_c2, tile_s),
                                   lambda b, c, s: (b, c, s)),
        ),
        compiler_params=pltpu.CompilerParams(
            dimension_semantics=("parallel", "parallel", "parallel"),
            vmem_limit_bytes=_vmem_limit(tile_c2 * tile_s * x.dtype.itemsize)),
    )(x3, cse, plane)

    return out3.reshape(B, C, D, H, W)


# ---------------------------------------------------------------------------
# Pure-JAX reference (matches the PyTorch forward semantics)
# ---------------------------------------------------------------------------
def tscse_reference(x, params, reduction):
    B, C, D, H, W = x.shape
    hid = C // reduction
    w1 = params["w1"].reshape(hid, C)
    w2 = params["w2"].reshape(C, hid)
    ws = params["ws"].reshape(C)
    wt = params["wt"].reshape(C)

    pool_c = x.mean(axis=(2, 3, 4))                                    # (B, C)
    z1 = jnp.maximum(pool_c @ w1.T + params["b1"], 0.0)
    z2 = z1 @ w2.T + params["b2"]
    cse = jax.nn.sigmoid(jax.nn.sigmoid(z2)).reshape(B, C, 1, 1, 1)

    pool_s = x.mean(axis=2)                                            # (B, C, H, W)
    s = jnp.einsum("bchw,c->bhw", pool_s, ws) + params["bs"][0]
    sse = jax.nn.sigmoid(jax.nn.sigmoid(s)).reshape(B, 1, 1, H, W)

    pool_t = x.mean(axis=(3, 4))                                       # (B, C, D)
    t = jnp.einsum("bcd,c->bd", pool_t, wt) + params["bt"][0]
    tse = jax.nn.sigmoid(jax.nn.sigmoid(t)).reshape(B, 1, D, 1, 1)

    return x * cse + x * sse + x * tse + x


if __name__ == "__main__":
    # Small shapes consistent with the module; explicit tiles chosen so the
    # sandbox run exercises the multi-tile accumulation paths of both kernels.
    B, C, D, H, W = 2, 16, 16, 16, 16
    reduction = 4
    hid = C // reduction

    key = jax.random.PRNGKey(0)
    k = jax.random.split(key, 9)
    x = jax.random.normal(k[0], (B, C, D, H, W), jnp.float32)
    params = {
        "w1": 0.2 * jax.random.normal(k[1], (hid, C, 1, 1, 1), jnp.float32),
        "b1": 0.1 * jax.random.normal(k[2], (hid,), jnp.float32),
        "w2": 0.2 * jax.random.normal(k[3], (C, hid, 1, 1, 1), jnp.float32),
        "b2": 0.1 * jax.random.normal(k[4], (C,), jnp.float32),
        "ws": 0.2 * jax.random.normal(k[5], (1, C, 1, 1, 1), jnp.float32),
        "bs": 0.1 * jax.random.normal(k[6], (1,), jnp.float32),
        "wt": 0.2 * jax.random.normal(k[7], (1, C, 1, 1, 1), jnp.float32),
        "bt": 0.1 * jax.random.normal(k[8], (1,), jnp.float32),
    }

    out = tscse_forward(x, params, reduction,
                        tile_c1=8, tile_c2=8, tile_s=1024)
    out = jax.block_until_ready(out)

    ref = tscse_reference(x, params, reduction)
    assert out.shape == (B, C, D, H, W)
    assert jnp.allclose(out, ref, atol=1e-5, rtol=1e-5), "mismatch vs reference"

    print("KERNEL_OK")
</pallas_src>

<mosaic_0001>
module attributes {stable_mosaic.version = 11 : i64} {
  func.func @_pool_branch_kernel(%arg0: i32, %arg1: i32, %arg2: memref<1x8x16x256xf32, #tpu.memory_space<vmem>>, %arg3: memref<16x11xf32, #tpu.memory_space<vmem>>, %arg4: memref<1x6xf32, #tpu.memory_space<vmem>>, %arg5: memref<1x16x1xf32, #tpu.memory_space<vmem>>, %arg6: memref<1x1x256xf32, #tpu.memory_space<vmem>>, %arg7: memref<1x1x16xf32, #tpu.memory_space<vmem>>, %arg8: memref<1x256xf32, #tpu.memory_space<vmem>>, %arg9: memref<1x16xf32, #tpu.memory_space<vmem>>, %arg10: memref<16x1xf32, #tpu.memory_space<vmem>>) attributes {dimension_semantics = [#tpu.dimension_semantics<parallel>, #tpu.dimension_semantics<arbitrary>], iteration_bounds = array<i64: 2, 2>, scalar_prefetch = 0 : i64, scratch_operands = 3 : i64, tpu.core_type = #tpu.core_type<tc>, window_params = [{transform_indices = @transform_0, window_bounds = array<i64: 1, 8, 16, 256>}, {pipeline_mode = #tpu.pipeline_mode<synchronous>, transform_indices = @transform_1, window_bounds = array<i64: 16, 11>}, {pipeline_mode = #tpu.pipeline_mode<synchronous>, transform_indices = @transform_2, window_bounds = array<i64: 1, 6>}, {transform_indices = @transform_3, window_bounds = array<i64: 1, 16, 1>}, {transform_indices = @transform_4, window_bounds = array<i64: 1, 1, 256>}, {transform_indices = @transform_5, window_bounds = array<i64: 1, 1, 16>}]} {
    %c0_i32 = arith.constant 0 : i32
    %0 = arith.cmpi eq, %arg1, %c0_i32 : i32
    %1 = arith.extui %0 : i1 to i32
    %c0_i32_0 = arith.constant 0 : i32
    %2 = arith.cmpi ne, %1, %c0_i32_0 : i32
    scf.if %2 {
      %cst_20 = arith.constant 0.000000e+00 : f32
      %36 = vector.broadcast %cst_20 : f32 to vector<1x256xf32>
      %c0_21 = arith.constant 0 : index
      %c0_22 = arith.constant 0 : index
      %37 = vector.load %arg8[%c0_21, %c0_22] : memref<1x256xf32, #tpu.memory_space<vmem>>, vector<1x256xf32>
      tpu.vector_store %arg8[%c0_21, %c0_22], %36 {strides = array<i32>} : memref<1x256xf32, #tpu.memory_space<vmem>>, vector<1x256xf32>,
      %cst_23 = arith.constant 0.000000e+00 : f32
      %38 = vector.broadcast %cst_23 : f32 to vector<1x16xf32>
      %c0_24 = arith.constant 0 : index
      %c0_25 = arith.constant 0 : index
      %39 = vector.load %arg9[%c0_24, %c0_25] : memref<1x16xf32, #tpu.memory_space<vmem>>, vector<1x16xf32>
      tpu.vector_store %arg9[%c0_24, %c0_25], %38 {strides = array<i32>} : memref<1x16xf32, #tpu.memory_space<vmem>>, vector<1x16xf32>,
    } else {
    }
    %c0 = arith.constant 0 : index
    %c0_1 = arith.constant 0 : index
    %c0_2 = arith.constant 0 : index
    %c0_3 = arith.constant 0 : index
    %3 = vector.load %arg2[%c0, %c0_1, %c0_2, %c0_3] : memref<1x8x16x256xf32, #tpu.memory_space<vmem>>, vector<1x8x16x256xf32>
    %4 = vector.shape_cast %3 : vector<1x8x16x256xf32> to vector<8x16x256xf32>
    %cst = arith.constant dense<0.000000e+00> : vector<8x16xf32>
    %5 = vector.multi_reduction <add>, %4, %cst [2] : vector<8x16x256xf32> to vector<8x16xf32>
    %cst_4 = arith.constant dense<0.000000e+00> : vector<8x256xf32>
    %6 = vector.multi_reduction <add>, %4, %cst_4 [1] : vector<8x16x256xf32> to vector<8x256xf32>
    %c8_i32 = arith.constant 8 : i32
    %7 = arith.muli %arg1, %c8_i32 : i32
    %8 = tpu.assume_multiple %7, 8 : i32
    %9 = arith.index_cast %8 : i32 to index
    %c0_5 = arith.constant 0 : index
    %10 = vector.load %arg3[%9, %c0_5] : memref<16x11xf32, #tpu.memory_space<vmem>>, vector<8x11xf32>
    %11 = vector.extract_strided_slice %10 {offsets = [0, 9], sizes = [8, 1], strides = [1, 1]} : vector<8x11xf32> to vector<8x1xf32>
    %12 = vector.extract_strided_slice %10 {offsets = [0, 10], sizes = [8, 1], strides = [1, 1]} : vector<8x11xf32> to vector<8x1xf32>
    %c0_6 = arith.constant 0 : index
    %c0_7 = arith.constant 0 : index
    %13 = vector.load %arg8[%c0_6, %c0_7] : memref<1x256xf32, #tpu.memory_space<vmem>>, vector<1x256xf32>
    %14 = vector.broadcast %11 : vector<8x1xf32> to vector<8x256xf32>
    %15 = arith.mulf %14, %6 : vector<8x256xf32>
    %cst_8 = arith.constant dense<0.000000e+00> : vector<256xf32>
    %16 = vector.multi_reduction <add>, %15, %cst_8 [0] : vector<8x256xf32> to vector<256xf32>
    %17 = vector.shape_cast %16 : vector<256xf32> to vector<1x256xf32>
    %18 = arith.addf %13, %17 : vector<1x256xf32>
    %c0_9 = arith.constant 0 : index
    %c0_10 = arith.constant 0 : index
    %19 = vector.load %arg8[%c0_9, %c0_10] : memref<1x256xf32, #tpu.memory_space<vmem>>, vector<1x256xf32>
    tpu.vector_store %arg8[%c0_9, %c0_10], %18 {strides = array<i32>} : memref<1x256xf32, #tpu.memory_space<vmem>>, vector<1x256xf32>,
    %c0_11 = arith.constant 0 : index
    %c0_12 = arith.constant 0 : index
    %20 = vector.load %arg9[%c0_11, %c0_12] : memref<1x16xf32, #tpu.memory_space<vmem>>, vector<1x16xf32>
    %21 = vector.broadcast %12 : vector<8x1xf32> to vector<8x16xf32>
    %22 = arith.mulf %21, %5 : vector<8x16xf32>
    %cst_13 = arith.constant dense<0.000000e+00> : vector<16xf32>
    %23 = vector.multi_reduction <add>, %22, %cst_13 [0] : vector<8x16xf32> to vector<16xf32>
    %24 = vector.shape_cast %23 : vector<16xf32> to vector<1x16xf32>
    %25 = arith.addf %20, %24 : vector<1x16xf32>
    %c0_14 = arith.constant 0 : index
    %c0_15 = arith.constant 0 : index
    %26 = vector.load %arg9[%c0_14, %c0_15] : memref<1x16xf32, #tpu.memory_space<vmem>>, vector<1x16xf32>
    tpu.vector_store %arg9[%c0_14, %c0_15], %25 {strides = array<i32>} : memref<1x16xf32, #tpu.memory_space<vmem>>, vector<1x16xf32>,
    %cst_16 = arith.constant dense<0.000000e+00> : vector<8xf32>
    %27 = vector.multi_reduction <add>, %5, %cst_16 [1] : vector<8x16xf32> to vector<8xf32>
    %28 = vector.shape_cast %27 : vector<8xf32> to vector<8x1xf32>
    %cst_17 = arith.constant 2.44140625E-4 : f32
    %29 = vector.broadcast %cst_17 : f32 to vector<8x1xf32>
    %30 = arith.mulf %28, %29 : vector<8x1xf32>
    %31 = arith.index_cast %8 : i32 to index
    %c0_18 = arith.constant 0 : index
    %32 = vector.load %arg10[%31, %c0_18] : memref<16x1xf32, #tpu.memory_space<vmem>>, vector<8x1xf32>
    tpu.vector_store %arg10[%31, %c0_18], %30 {strides = array<i32>} : memref<16x1xf32, #tpu.memory_space<vmem>>, vector<8x1xf32>,
    %c1_i32 = arith.constant 1 : i32
    %33 = arith.cmpi eq, %arg1, %c1_i32 : i32
    %34 = arith.extui %33 : i1 to i32
    %c0_i32_19 = arith.constant 0 : i32
    %35 = arith.cmpi ne, %34, %c0_i32_19 : i32
    scf.if %35 {
      %c0_20 = arith.constant 0 : index
      %c0_21 = arith.constant 0 : index
      %36 = vector.load %arg3[%c0_20, %c0_21] : memref<16x11xf32, #tpu.memory_space<vmem>>, vector<16x11xf32>
      %37 = vector.extract_strided_slice %36 {offsets = [0, 0], sizes = [16, 4], strides = [1, 1]} : vector<16x11xf32> to vector<16x4xf32>
      %38 = vector.extract_strided_slice %36 {offsets = [0, 4], sizes = [16, 4], strides = [1, 1]} : vector<16x11xf32> to vector<16x4xf32>
      %39 = vector.extract_strided_slice %36 {offsets = [0, 8], sizes = [16, 1], strides = [1, 1]} : vector<16x11xf32> to vector<16x1xf32>
      %c0_22 = arith.constant 0 : index
      %c0_23 = arith.constant 0 : index
      %40 = vector.load %arg4[%c0_22, %c0_23] : memref<1x6xf32, #tpu.memory_space<vmem>>, vector<1x6xf32>
      %41 = vector.extract_strided_slice %40 {offsets = [0, 0], sizes = [1, 4], strides = [1, 1]} : vector<1x6xf32> to vector<1x4xf32>
      %42 = vector.extract_strided_slice %40 {offsets = [0, 4], sizes = [1, 1], strides = [1, 1]} : vector<1x6xf32> to vector<1x1xf32>
      %43 = vector.extract_strided_slice %40 {offsets = [0, 5], sizes = [1, 1], strides = [1, 1]} : vector<1x6xf32> to vector<1x1xf32>
      %c0_24 = arith.constant 0 : index
      %c0_25 = arith.constant 0 : index
      %44 = vector.load %arg10[%c0_24, %c0_25] : memref<16x1xf32, #tpu.memory_space<vmem>>, vector<16x1xf32>
      %45 = vector.broadcast %44 : vector<16x1xf32> to vector<16x4xf32>
      %46 = arith.mulf %37, %45 : vector<16x4xf32>
      %cst_26 = arith.constant dense<0.000000e+00> : vector<4xf32>
      %47 = vector.multi_reduction <add>, %46, %cst_26 [0] : vector<16x4xf32> to vector<4xf32>
      %48 = vector.shape_cast %47 : vector<4xf32> to vector<1x4xf32>
      %49 = arith.addf %48, %41 : vector<1x4xf32>
      %cst_27 = arith.constant 0.000000e+00 : f32
      %50 = vector.broadcast %cst_27 : f32 to vector<1x4xf32>
      %51 = arith.maximumf %49, %50 : vector<1x4xf32>
      %52 = vector.broadcast %51 : vector<1x4xf32> to vector<16x4xf32>
      %53 = arith.mulf %38, %52 : vector<16x4xf32>
      %cst_28 = arith.constant dense<0.000000e+00> : vector<16xf32>
      %54 = vector.multi_reduction <add>, %53, %cst_28 [1] : vector<16x4xf32> to vector<16xf32>
      %55 = vector.shape_cast %54 : vector<16xf32> to vector<16x1xf32>
      %56 = arith.addf %55, %39 : vector<16x1xf32>
      %57 = arith.negf %56 : vector<16x1xf32>
      %58 = math.exp %57 : vector<16x1xf32>
      %cst_29 = arith.constant 1.000000e+00 : f32
      %59 = vector.broadcast %cst_29 : f32 to vector<16x1xf32>
      %60 = arith.addf %59, %58 : vector<16x1xf32>
      %61 = arith.divf %59, %60 : vector<16x1xf32>
      %62 = arith.negf %61 : vector<16x1xf32>
      %63 = math.exp %62 : vector<16x1xf32>
      %cst_30 = arith.constant 1.000000e+00 : f32
      %64 = vector.broadcast %cst_30 : f32 to vector<16x1xf32>
      %65 = arith.addf %64, %63 : vector<16x1xf32>
      %66 = arith.divf %64, %65 : vector<16x1xf32>
      %c0_31 = arith.constant 0 : index
      %c0_32 = arith.constant 0 : index
      %c0_33 = arith.constant 0 : index
      %67 = vector.load %arg5[%c0_31, %c0_32, %c0_33] : memref<1x16x1xf32, #tpu.memory_space<vmem>>, vector<1x16x1xf32>
      %68 = vector.shape_cast %67 : vector<1x16x1xf32> to vector<16x1xf32>
      %69 = vector.shape_cast %66 : vector<16x1xf32> to vector<1x16x1xf32>
      tpu.vector_store %arg5[%c0_31, %c0_32, %c0_33], %69 {strides = array<i32>} : memref<1x16x1xf32, #tpu.memory_space<vmem>>, vector<1x16x1xf32>,
      %c0_34 = arith.constant 0 : index
      %c0_35 = arith.constant 0 : index
      %70 = vector.load %arg8[%c0_34, %c0_35] : memref<1x256xf32, #tpu.memory_space<vmem>>, vector<1x256xf32>
      %cst_36 = arith.constant 6.250000e-02 : f32
      %71 = vector.broadcast %cst_36 : f32 to vector<1x256xf32>
      %72 = arith.mulf %70, %71 : vector<1x256xf32>
      %73 = vector.broadcast %42 : vector<1x1xf32> to vector<1x256xf32>
      %74 = arith.addf %72, %73 : vector<1x256xf32>
      %75 = arith.negf %74 : vector<1x256xf32>
      %76 = math.exp %75 : vector<1x256xf32>
      %cst_37 = arith.constant 1.000000e+00 : f32
      %77 = vector.broadcast %cst_37 : f32 to vector<1x256xf32>
      %78 = arith.addf %77, %76 : vector<1x256xf32>
      %79 = arith.divf %77, %78 : vector<1x256xf32>
      %80 = arith.negf %79 : vector<1x256xf32>
      %81 = math.exp %80 : vector<1x256xf32>
      %cst_38 = arith.constant 1.000000e+00 : f32
      %82 = vector.broadcast %cst_38 : f32 to vector<1x256xf32>
      %83 = arith.addf %82, %81 : vector<1x256xf32>
      %84 = arith.divf %82, %83 : vector<1x256xf32>
      %c0_39 = arith.constant 0 : index
      %c0_40 = arith.constant 0 : index
      %c0_41 = arith.constant 0 : index
      %85 = vector.load %arg6[%c0_39, %c0_40, %c0_41] : memref<1x1x256xf32, #tpu.memory_space<vmem>>, vector<1x1x256xf32>
      %86 = vector.shape_cast %85 : vector<1x1x256xf32> to vector<1x256xf32>
      %87 = vector.shape_cast %84 : vector<1x256xf32> to vector<1x1x256xf32>
      tpu.vector_store %arg6[%c0_39, %c0_40, %c0_41], %87 {strides = array<i32>} : memref<1x1x256xf32, #tpu.memory_space<vmem>>, vector<1x1x256xf32>,
      %c0_42 = arith.constant 0 : index
      %c0_43 = arith.constant 0 : index
      %88 = vector.load %arg9[%c0_42, %c0_43] : memref<1x16xf32, #tpu.memory_space<vmem>>, vector<1x16xf32>
      %cst_44 = arith.constant 3.906250e-03 : f32
      %89 = vector.broadcast %cst_44 : f32 to vector<1x16xf32>
      %90 = arith.mulf %88, %89 : vector<1x16xf32>
      %91 = vector.broadcast %43 : vector<1x1xf32> to vector<1x16xf32>
      %92 = arith.addf %90, %91 : vector<1x16xf32>
      %93 = arith.negf %92 : vector<1x16xf32>
      %94 = math.exp %93 : vector<1x16xf32>
      %cst_45 = arith.constant 1.000000e+00 : f32
      %95 = vector.broadcast %cst_45 : f32 to vector<1x16xf32>
      %96 = arith.addf %95, %94 : vector<1x16xf32>
      %97 = arith.divf %95, %96 : vector<1x16xf32>
      %98 = arith.negf %97 : vector<1x16xf32>
      %99 = math.exp %98 : vector<1x16xf32>
      %cst_46 = arith.constant 1.000000e+00 : f32
      %100 = vector.broadcast %cst_46 : f32 to vector<1x16xf32>
      %101 = arith.addf %100, %99 : vector<1x16xf32>
      %102 = arith.divf %100, %101 : vector<1x16xf32>
      %c0_47 = arith.constant 0 : index
      %c0_48 = arith.constant 0 : index
      %c0_49 = arith.constant 0 : index
      %103 = vector.load %arg7[%c0_47, %c0_48, %c0_49] : memref<1x1x16xf32, #tpu.memory_space<vmem>>, vector<1x1x16xf32>
      %104 = vector.shape_cast %103 : vector<1x1x16xf32> to vector<1x16xf32>
      %105 = vector.shape_cast %102 : vector<1x16xf32> to vector<1x1x16xf32>
      tpu.vector_store %arg7[%c0_47, %c0_48, %c0_49], %105 {strides = array<i32>} : memref<1x1x16xf32, #tpu.memory_space<vmem>>, vector<1x1x16xf32>,
    } else {
    }
    return
  }
  func.func @transform_0(%arg0: i32, %arg1: i32) -> (i32, i32, i32, i32) {
    %c0_i32 = arith.constant 0 : i32
    %c0_i32_0 = arith.constant 0 : i32
    %c0_i32_1 = arith.constant 0 : i32
    return %arg0, %arg1, %c0_i32, %c0_i32_0 : i32, i32, i32, i32
  }
  func.func @transform_1(%arg0: i32, %arg1: i32) -> (i32, i32) {
    %c0_i32 = arith.constant 0 : i32
    %c0_i32_0 = arith.constant 0 : i32
    %c0_i32_1 = arith.constant 0 : i32
    return %c0_i32, %c0_i32_0 : i32, i32
  }
  func.func @transform_2(%arg0: i32, %arg1: i32) -> (i32, i32) {
    %c0_i32 = arith.constant 0 : i32
    %c0_i32_0 = arith.constant 0 : i32
    %c0_i32_1 = arith.constant 0 : i32
    return %c0_i32, %c0_i32_0 : i32, i32
  }
  func.func @transform_3(%arg0: i32, %arg1: i32) -> (i32, i32, i32) {
    %c0_i32 = arith.constant 0 : i32
    %c0_i32_0 = arith.constant 0 : i32
    %c0_i32_1 = arith.constant 0 : i32
    return %arg0, %c0_i32, %c0_i32_0 : i32, i32, i32
  }
  func.func @transform_4(%arg0: i32, %arg1: i32) -> (i32, i32, i32) {
    %c0_i32 = arith.constant 0 : i32
    %c0_i32_0 = arith.constant 0 : i32
    %c0_i32_1 = arith.constant 0 : i32
    return %arg0, %c0_i32, %c0_i32_0 : i32, i32, i32
  }
  func.func @transform_5(%arg0: i32, %arg1: i32) -> (i32, i32, i32) {
    %c0_i32 = arith.constant 0 : i32
    %c0_i32_0 = arith.constant 0 : i32
    %c0_i32_1 = arith.constant 0 : i32
    return %arg0, %c0_i32, %c0_i32_0 : i32, i32, i32
  }
}

</mosaic_0001>

<llo_original>
// kernel: tpu_custom_call.1
$region0: #{tpu_custom_call.1}
  #allocation0 [shape = 'u32[]', space=smem, size = 0x4, offset = 0x4, fixed_abs, tag = 'smem constant byte address 0x4 - core index']
  #allocation1 [shape = 'u32[144,128]{1,0:T(1,128)}', space=vmem, size = 0x12000, scoped, tag = 'internal scratch']
  #allocation2 [shape = 'f32[1,256]{1,0:T(1,128)}', space=vmem, size = 0x400, scoped, tag = 'scratch operand']
  #allocation3 [shape = 'f32[1,16]{1,0:T(1,128)}', space=vmem, size = 0x200, scoped, tag = 'scratch operand']
  #allocation4 [shape = 'f32[16,1]{1,0:T(8,128)}', space=vmem, size = 0x2000, scoped, tag = 'scratch operand']
  %s0 = inlined_call_operand.hbm [shape: f32[2,16,16,256], index: 0, kind: input, shape index: {}]
  %s1 = inlined_call_operand.hbm [shape: f32[16,11], index: 1, kind: input, shape index: {}]
  %s2 = inlined_call_operand.vmem [shape: f32[1,6], index: 2, kind: input, shape index: {}]
  %s3 = inlined_call_operand.vmem [shape: f32[2,16,1], index: 3, kind: output, shape index: {0}]
  %s4 = inlined_call_operand.hbm [shape: f32[2,1,256], index: 4, kind: output, shape index: {1}]
  %s5 = inlined_call_operand.hbm [shape: f32[2,1,16], index: 5, kind: output, shape index: {2}]
  %6 = xla_tuple %s3, %s4, %s5
  %s7 = sld [smem:[#allocation0]]
  $region77: #{tpu_custom_call.1} parent=0
    _
  %s9 = ssub.s32 1, %s7
  %s10 = scalar_select 0, %s9, %s7
  $region1: #{tpu_custom_call.1} parent=0
    #allocation5 [shape = 'u8[262144]{0}', space=vmem, size = 0x40000, scoped, tag = 'input window, operand 0']
    #allocation6 [shape = 's32[2]{0}', space=sflag, size = 0x8, scoped, tag = 'scoped memory for tpu_custom_call.1']
    #allocation7 [shape = 's32[2]{0}', space=sflag, size = 0x8, scoped, tag = 'scoped memory for tpu_custom_call.1']
    #allocation8 [shape = 'u8[8192]{0}', space=vmem, size = 0x2000, scoped, tag = 'input window, operand 1, single buffered']
    #allocation9 [shape = 's32[1]{0}', space=sflag, size = 0x4, scoped, tag = 'scoped memory for tpu_custom_call.1']
    #allocation10 [shape = 'u8[2048]{0}', space=vmem, size = 0x800, scoped, tag = 'output window, operand 1']
    #allocation11 [shape = 'u8[1024]{0}', space=vmem, size = 0x400, scoped, tag = 'output window, operand 2']
    #allocation12 [shape = 's32[2]{0}', space=sflag, size = 0x8, scoped, tag = 'scoped memory for tpu_custom_call.1']
    %11 = vsyncpa [#allocation6], 0
    %s12 = scalar_lea.sflag [#allocation6], 1
    %13 = vsyncpa %s12, 0
    %14 = vsyncpa [#allocation9], 0
    %15 = vsyncpa [#allocation7], 0
    %s16 = scalar_lea.sflag [#allocation7], 1
    %17 = vsyncpa %s16, 0
    %18 = vsyncpa [#allocation12], 0
    %s19 = scalar_lea.sflag [#allocation12], 1
    %20 = vsyncpa %s19, 0
    loop: start=0, step=1, limit=6
    $region2: #{tpu_custom_call.1} parent=1 // loop_pre_header
      _
    $region3: #{tpu_custom_call.1} parent=1 // loop_header
      %s22 = sphi 0, %s26
      %p23 = scmp.ge.s32.totalorder %s22, 6
      %s29 = sphi 0, %s41
      %s30 = sphi 0, %s37
      %s31 = sphi 0, %s29
      %s32 = sphi 0, %s30
      %s33 = sphi 0, %s31
      %s34 = sphi 0, %s32
      %s46 = sphi 0, %s48
      %s49 = sphi 0, %s46
      %s50 = sphi 0, %s49
      %s66 = sphi 0, %s50
      %s70 = sphi 0, %s70
      %s72 = sphi 0, %s70
      %s73 = sphi 0, %s72
      %s87 = sphi 0, %s73
      %s91 = sphi 0, %s91
      %s93 = sphi 0, %s91
      %s94 = sphi 0, %s93
      %s108 = sphi 0, %s94
      %s114 = sphi 0, %s116
      %s117 = sphi 0, %s114
      %s118 = sphi 0, %s117
      %s134 = sphi 0, %s118
      %s140 = sphi 0, %s142
      %s143 = sphi 0, %s140
      %s144 = sphi 0, %s143
      %s160 = sphi 0, %s144
      %s166 = sphi 0, %s168
      %s169 = sphi 0, %s166
      %s170 = sphi 0, %s169
      %s186 = sphi 0, %s170
    $region4: #{tpu_custom_call.1} parent=1 // loop_header_branch
      %25 = sbr.rel (%p23) target = $region8
    $region5: #{tpu_custom_call.1} parent=1 // loop_body
      %s27 = ssub.s32 %s22, 1
      %s28 = ssub.s32 %s22, 2
      %s35 = sadd.s32 1, %s30
      %p36 = scmp.ge.s32.totalorder %s35, 2
      %s37 = scalar_select %p36, 0, %s35
      %s38 = sadd.s32 1, %s29
      %s39 = scalar_select %p36, %s38, %s29
      %p40 = scmp.ge.s32.totalorder %s39, 2
      %s41 = scalar_select %p40, 0, %s39
      %s42 = ssub.s32 %s29, %s41
      %s43 = ssub.s32 %s30, %s37
      %s44 = sor.u32 %s42, %s43
      %p45 = scmp.eq.s32.totalorder %s44, 0
      %s47 = sadd.s32 %s46, 1
      %s48 = scalar_select %p45, %s46, %s47
      %p51 = pneg %p45
      %p52 = scmp.eq.s32.totalorder %s22, 3
      %p53 = por %p51, %p52
      %p54 = scmp.ne.s32.totalorder %s46, %s49
      %p55 = scmp.eq.s32.totalorder %s22, 0
      %p56 = por %p54, %p55
      %p57 = scmp.ne.s32.totalorder %s46, %s49
      %p58 = scmp.eq.s32.totalorder %s27, 3
      %p59 = por %p57, %p58
      %p60 = scmp.ne.s32.totalorder %s49, %s50
      %p61 = scmp.eq.s32.totalorder %s27, 0
      %p62 = por %p60, %p61
      %p63 = scmp.ne.s32.totalorder %s49, %s50
      %p64 = scmp.eq.s32.totalorder %s28, 3
      %p65 = por %p63, %p64
      %p67 = scmp.ne.s32.totalorder %s50, %s66
      %p68 = scmp.eq.s32.totalorder %s28, 0
      %p69 = por %p67, %p68
      %s71 = sadd.s32 %s70, 1
      %p74 = scmp.eq.s32.totalorder %s22, 3
      %p75 = scmp.ne.s32.totalorder %s70, %s72
      %p76 = scmp.eq.s32.totalorder %s22, 0
      %p77 = por %p75, %p76
      %p78 = scmp.ne.s32.totalorder %s70, %s72
      %p79 = scmp.eq.s32.totalorder %s27, 3
      %p80 = por %p78, %p79
      %p81 = scmp.ne.s32.totalorder %s72, %s73
      %p82 = scmp.eq.s32.totalorder %s27, 0
      %p83 = por %p81, %p82
      %p84 = scmp.ne.s32.totalorder %s72, %s73
      %p85 = scmp.eq.s32.totalorder %s28, 3
      %p86 = por %p84, %p85
      %p88 = scmp.ne.s32.totalorder %s73, %s87
      %p89 = scmp.eq.s32.totalorder %s28, 0
      %p90 = por %p88, %p89
      %s92 = sadd.s32 %s91, 1
      %p95 = scmp.eq.s32.totalorder %s22, 3
      %p96 = scmp.ne.s32.totalorder %s91, %s93
      %p97 = scmp.eq.s32.totalorder %s22, 0
      %p98 = por %p96, %p97
      %p99 = scmp.ne.s32.totalorder %s91, %s93
      %p100 = scmp.eq.s32.totalorder %s27, 3
      %p101 = por %p99, %p100
      %p102 = scmp.ne.s32.totalorder %s93, %s94
      %p103 = scmp.eq.s32.totalorder %s27, 0
      %p104 = por %p102, %p103
      %p105 = scmp.ne.s32.totalorder %s93, %s94
      %p106 = scmp.eq.s32.totalorder %s28, 3
      %p107 = por %p105, %p106
      %p109 = scmp.ne.s32.totalorder %s94, %s108
      %p110 = scmp.eq.s32.totalorder %s28, 0
      %p111 = por %p109, %p110
      %s112 = ssub.s32 %s29, %s41
      %p113 = scmp.eq.s32.totalorder %s112, 0
      %s115 = sadd.s32 %s114, 1
      %s116 = scalar_select %p113, %s114, %s115
      %p119 = pneg %p113
      %p120 = scmp.eq.s32.totalorder %s22, 3
      %p121 = por %p119, %p120
      %p122 = scmp.ne.s32.totalorder %s114, %s117
      %p123 = scmp.eq.s32.totalorder %s22, 0
      %p124 = por %p122, %p123
      %p125 = scmp.ne.s32.totalorder %s114, %s117
      %p126 = scmp.eq.s32.totalorder %s27, 3
      %p127 = por %p125, %p126
      %p128 = scmp.ne.s32.totalorder %s117, %s118
      %p129 = scmp.eq.s32.totalorder %s27, 0
      %p130 = por %p128, %p129
      %p131 = scmp.ne.s32.totalorder %s117, %s118
      %p132 = scmp.eq.s32.totalorder %s28, 3
      %p133 = por %p131, %p132
      %p135 = scmp.ne.s32.totalorder %s118, %s134
      %p136 = scmp.eq.s32.totalorder %s28, 0
      %p137 = por %p135, %p136
      %s138 = ssub.s32 %s29, %s41
      %p139 = scmp.eq.s32.totalorder %s138, 0
      %s141 = sadd.s32 %s140, 1
      %s142 = scalar_select %p139, %s140, %s141
      %p145 = pneg %p139
      %p146 = scmp.eq.s32.totalorder %s22, 3
      %p147 = por %p145, %p146
      %p148 = scmp.ne.s32.totalorder %s140, %s143
      %p149 = scmp.eq.s32.totalorder %s22, 0
      %p150 = por %p148, %p149
      %p151 = scmp.ne.s32.totalorder %s140, %s143
      %p152 = scmp.eq.s32.totalorder %s27, 3
      %p153 = por %p151, %p152
      %p154 = scmp.ne.s32.totalorder %s143, %s144
      %p155 = scmp.eq.s32.totalorder %s27, 0
      %p156 = por %p154, %p155
      %p157 = scmp.ne.s32.totalorder %s143, %s144
      %p158 = scmp.eq.s32.totalorder %s28, 3
      %p159 = por %p157, %p158
      %p161 = scmp.ne.s32.totalorder %s144, %s160
      %p162 = scmp.eq.s32.totalorder %s28, 0
      %p163 = por %p161, %p162
      %s164 = ssub.s32 %s29, %s41
      %p165 = scmp.eq.s32.totalorder %s164, 0
      %s167 = sadd.s32 %s166, 1
      %s168 = scalar_select %p165, %s166, %s167
      %p171 = pneg %p165
      %p172 = scmp.eq.s32.totalorder %s22, 3
      %p173 = por %p171, %p172
      %p174 = scmp.ne.s32.totalorder %s166, %s169
      %p175 = scmp.eq.s32.totalorder %s22, 0
      %p176 = por %p174, %p175
      %p177 = scmp.ne.s32.totalorder %s166, %s169
      %p178 = scmp.eq.s32.totalorder %s27, 3
      %p179 = por %p177, %p178
      %p180 = scmp.ne.s32.totalorder %s169, %s170
      %p181 = scmp.eq.s32.totalorder %s27, 0
      %p182 = por %p180, %p181
      %p183 = scmp.ne.s32.totalorder %s169, %s170
      %p184 = scmp.eq.s32.totalorder %s28, 3
      %p185 = por %p183, %p184
      %p187 = scmp.ne.s32.totalorder %s170, %s186
      %p188 = scmp.eq.s32.totalorder %s28, 0
      %p189 = por %p187, %p188
      %p190 = scmp.le.s32.totalorder 1, %s22
      %p191 = scmp.lt.s32.totalorder %s22, 5
      %p192 = pnand %p190, %p191
      %p193 = pneg %p192
      // Predicated region
      $region9: #{tpu_custom_call.1} parent=5 // pred_check
        _
      $region10: #{tpu_custom_call.1} parent=5 // pred_check_branch
        %195 = sbr.rel (%p192) target = $region12
      $region11: #{tpu_custom_call.1} parent=5 // pred_region
        %s196 = ssub.s32 %s22, 1
        // Predicated region
        $region13: #{tpu_custom_call.1} parent=11 // pred_check
          %p197 = pneg %p83
        $region14: #{tpu_custom_call.1} parent=11 // pred_check_branch
          %199 = sbr.rel (%p197) target = $region16
        $region15: #{tpu_custom_call.1} parent=11 // pred_region
          %s201 = ssub.s32 256, 256
          %202 = vsyncadd [#allocation9], %s201
          %s203 = sshll.u32 [#allocation8], 4
          %s204 = int_to_ptr.vmem [resolvable:$true] %s203
          %209 = dma.hbm_to_vmem [thread:$0]  %s1, 256, %s204, [#allocation9], 128, 128, 8
        $region16: #{tpu_custom_call.1} parent=11 // pred_fallthru
          _
        // Predicated region
        $region17: #{tpu_custom_call.1} parent=11 // pred_check
          %p210 = pneg %p104
        $region18: #{tpu_custom_call.1} parent=11 // pred_check_branch
          %212 = sbr.rel (%p210) target = $region20
        $region19: #{tpu_custom_call.1} parent=11 // pred_region
          _
        $region20: #{tpu_custom_call.1} parent=11 // pred_fallthru
          _
      $region12: #{tpu_custom_call.1} parent=5 // pred_fallthru
        _
      %p213 = scmp.lt.s32.totalorder %s22, 4
      // Predicated region
      $region21: #{tpu_custom_call.1} parent=5 // pred_check
        %p214 = pneg %p213
      $region22: #{tpu_custom_call.1} parent=5 // pred_check_branch
        %216 = sbr.rel (%p214) target = $region24
      $region23: #{tpu_custom_call.1} parent=5 // pred_region
        // Predicated region
        $region25: #{tpu_custom_call.1} parent=23 // pred_check
          %p217 = pneg %p56
        $region26: #{tpu_custom_call.1} parent=23 // pred_check_branch
          %219 = sbr.rel (%p217) target = $region28
        $region27: #{tpu_custom_call.1} parent=23 // pred_region
          %s220 = sand.u32 %s46, 1
          %s221 = scalar_lea.sflag [#allocation6], %s220
          %s222 = sand.u32 %s46, 1
          %s223 = smul.addr %s222, 256
          %s224 = scalar_lea.vmem [#allocation5], %s223
          %s225 = smul.u32 8, %s30
          %s227 = ssub.s32 4096, 4096
          %228 = vsyncadd %s221, %s227
          %s229 = smul.addr %s225, 4
          %s230 = smul.addr %s29, 64
          %s231 = sadd.s32 %s229, %s230
          %s232 = smul.addr %s231, 128
          %s233 = scalar_lea.hbm %s0, %s232
          %s234 = sshll.u32 %s224, 4
          %s235 = int_to_ptr.vmem [resolvable:$true] %s234
          %240 = dma.hbm_to_vmem [thread:$0]  %s233, 4096, %s235, %s221, 256, 256, 16
        $region28: #{tpu_custom_call.1} parent=23 // pred_fallthru
          _
      $region24: #{tpu_custom_call.1} parent=5 // pred_fallthru
        _
      %p241 = scmp.le.s32.totalorder 1, %s22
      %p242 = scmp.lt.s32.totalorder %s22, 5
      %p243 = pnand %p241, %p242
      %p244 = pneg %p243
      // Predicated region
      $region29: #{tpu_custom_call.1} parent=5 // pred_check
        _
      $region30: #{tpu_custom_call.1} parent=5 // pred_check_branch
        %246 = sbr.rel (%p243) target = $region32
      $region31: #{tpu_custom_call.1} parent=5 // pred_region
        %s247 = ssub.s32 %s22, 1
        %s248 = sand.u32 %s49, 1
        %s249 = scalar_lea.sflag [#allocation6], %s248
        %s250 = sand.u32 %s49, 1
        %s251 = smul.addr %s250, 256
        %s252 = scalar_lea.vmem [#allocation5], %s251
        // Predicated region
        $region33: #{tpu_custom_call.1} parent=31 // pred_check
          %p253 = pneg %p62
        $region34: #{tpu_custom_call.1} parent=31 // pred_check_branch
          %255 = sbr.rel (%p253) target = $region36
        $region35: #{tpu_custom_call.1} parent=31 // pred_region
          %256 = dma.done %s249, 4096
        $region36: #{tpu_custom_call.1} parent=31 // pred_fallthru
          _
        // Predicated region
        $region37: #{tpu_custom_call.1} parent=31 // pred_check
          %p257 = pneg %p83
        $region38: #{tpu_custom_call.1} parent=31 // pred_check_branch
          %259 = sbr.rel (%p257) target = $region40
        $region39: #{tpu_custom_call.1} parent=31 // pred_region
          %260 = dma.done [#allocation9], 256
        $region40: #{tpu_custom_call.1} parent=31 // pred_fallthru
          _
        %s261 = sand.u32 %s49, 1
        %s262 = scalar_lea.sflag [#allocation6], %s261
        %s263 = sand.u32 %s49, 1
        %s264 = smul.addr %s263, 256
        %s265 = scalar_lea.vmem [#allocation5], %s264
        %p266 = pneg %p62
        %p267 = pneg %p59
        %p268 = pneg %p83
        %p269 = pneg %p80
        %p270 = pneg %p104
        %p271 = pneg %p101
        %p272 = pneg %p130
        %p273 = pneg %p127
        %p274 = scmp.lt.s32.totalorder %s31, 1
        %s275 = scalar_select %p274, %s31, 1
        %s276 = smul.addr %s275, 2
        %s277 = smul.addr %s276, 8
        %s278 = scalar_lea.vmem %s3, %s277
        %p279 = pneg %p156
        %p280 = pneg %p153
        %s281 = sand.u32 %s143, 1
        %s282 = scalar_lea.sflag [#allocation7], %s281
        %s283 = sand.u32 %s143, 1
        %s284 = smul.addr %s283, 2
        %s285 = scalar_lea.vmem [#allocation10], %s284
        %p286 = pneg %p182
        %p287 = pneg %p179
        %s288 = sand.u32 %s169, 1
        %s289 = scalar_lea.sflag [#allocation12], %s288
        %s290 = sand.u32 %s169, 1
        %s291 = scalar_lea.vmem [#allocation11], %s290
        %s292 = smul.u32 8, %s32
        %p293 = scmp.lt.s32.totalorder %s31, 1
        %s294 = scalar_select %p293, %s31, 1
        %s295 = smul.addr %s294, 2
        %s296 = smul.addr %s295, 8
        %s297 = scalar_lea.vmem %s3, %s296
        %p298 = scmp.eq.s32.totalorder %s32, 0
        // Predicated region
        $region41: #{tpu_custom_call.1} parent=31 // pred_check
          %p299 = pneg %p298
        $region42: #{tpu_custom_call.1} parent=31 // pred_check_branch
          %301 = sbr.rel (%p299) target = $region44
        $region43: #{tpu_custom_call.1} parent=31 // pred_region
          %v302 = vlaneseq
          %vm303 = vcmp.ge.s32.totalorder %v302, 0
          %vm304 = vcmp.lt.s32.totalorder %v302, 256
          %vm305 = vmand %vm303, %vm304
          %306 = vst.msk [vmem:[#allocation2] sm:$0x3] %vm305, 0.0
          %vm307 = vcmask 122880
          %308 = vst.msk [vmem:[#allocation3] sm:$0x1] %vm307, 0.0
        $region44: #{tpu_custom_call.1} parent=31 // pred_fallthru
          _
        %v309 = vld [vmem:[%s252] sm:$0xff]
        %v310 = vld [vmem:[%s252 + $0x8] sm:$0xff]
        %v311 = vld [vmem:[%s252 + $0x10] sm:$0xff]
        %v312 = vld [vmem:[%s252 + $0x18] sm:$0xff]
        %v313 = vld [vmem:[%s252 + $0x20] sm:$0xff]
        %v314 = vld [vmem:[%s252 + $0x28] sm:$0xff]
        %v315 = vld [vmem:[%s252 + $0x30] sm:$0xff]
        %v316 = vld [vmem:[%s252 + $0x38] sm:$0xff]
        %v317 = vld [vmem:[%s252 + $0x40] sm:$0xff]
        %v318 = vld [vmem:[%s252 + $0x48] sm:$0xff]
        %v319 = vld [vmem:[%s252 + $0x50] sm:$0xff]
        %v320 = vld [vmem:[%s252 + $0x58] sm:$0xff]
        %v321 = vld [vmem:[%s252 + $0x60] sm:$0xff]
        %v322 = vld [vmem:[%s252 + $0x68] sm:$0xff]
        %v323 = vld [vmem:[%s252 + $0x70] sm:$0xff]
        %v324 = vld [vmem:[%s252 + $0x78] sm:$0xff]
        %v325 = vld [vmem:[%s252 + $0x80] sm:$0xff]
        %v326 = vld [vmem:[%s252 + $0x88] sm:$0xff]
        %v327 = vld [vmem:[%s252 + $0x90] sm:$0xff]
        %v328 = vld [vmem:[%s252 + $0x98] sm:$0xff]
        %v329 = vld [vmem:[%s252 + $0xa0] sm:$0xff]
        %v330 = vld [vmem:[%s252 + $0xa8] sm:$0xff]
        %v331 = vld [vmem:[%s252 + $0xb0] sm:$0xff]
        %v332 = vld [vmem:[%s252 + $0xb8] sm:$0xff]
        %v333 = vld [vmem:[%s252 + $0xc0] sm:$0xff]
        %v334 = vld [vmem:[%s252 + $0xc8] sm:$0xff]
        %v335 = vld [vmem:[%s252 + $0xd0] sm:$0xff]
        %v336 = vld [vmem:[%s252 + $0xd8] sm:$0xff]
        %v337 = vld [vmem:[%s252 + $0xe0] sm:$0xff]
        %v338 = vld [vmem:[%s252 + $0xe8] sm:$0xff]
        %v339 = vld [vmem:[%s252 + $0xf0] sm:$0xff]
        %v340 = vld [vmem:[%s252 + $0xf8] sm:$0xff]
        %v341 = vadd.f32 %v309, %v310
        %342 = vadd.xlane.f32.xlu0 %v341
        %v343 = vpop.xlane.xlu0 %342
        %v344 = vadd.f32 %v311, %v312
        %345 = vadd.xlane.f32.xlu0 %v344
        %v346 = vpop.xlane.xlu0 %345
        %v347 = vadd.f32 %v313, %v314
        %348 = vadd.xlane.f32.xlu0 %v347
        %v349 = vpop.xlane.xlu0 %348
        %v350 = vadd.f32 %v315, %v316
        %351 = vadd.xlane.f32.xlu0 %v350
        %v352 = vpop.xlane.xlu0 %351
        %v353 = vadd.f32 %v317, %v318
        %354 = vadd.xlane.f32.xlu0 %v353
        %v355 = vpop.xlane.xlu0 %354
        %v356 = vadd.f32 %v319, %v320
        %357 = vadd.xlane.f32.xlu0 %v356
        %v358 = vpop.xlane.xlu0 %357
        %v359 = vadd.f32 %v321, %v322
        %360 = vadd.xlane.f32.xlu0 %v359
        %v361 = vpop.xlane.xlu0 %360
        %v362 = vadd.f32 %v323, %v324
        %363 = vadd.xlane.f32.xlu0 %v362
        %v364 = vpop.xlane.xlu0 %363
        %v365 = vadd.f32 %v325, %v326
        %366 = vadd.xlane.f32.xlu0 %v365
        %v367 = vpop.xlane.xlu0 %366
        %v368 = vadd.f32 %v327, %v328
        %369 = vadd.xlane.f32.xlu0 %v368
        %v370 = vpop.xlane.xlu0 %369
        %v371 = vadd.f32 %v329, %v330
        %372 = vadd.xlane.f32.xlu0 %v371
        %v373 = vpop.xlane.xlu0 %372
        %v374 = vadd.f32 %v331, %v332
        %375 = vadd.xlane.f32.xlu0 %v374
        %v376 = vpop.xlane.xlu0 %375
        %v377 = vadd.f32 %v333, %v334
        %378 = vadd.xlane.f32.xlu0 %v377
        %v379 = vpop.xlane.xlu0 %378
        %v380 = vadd.f32 %v335, %v336
        %381 = vadd.xlane.f32.xlu0 %v380
        %v382 = vpop.xlane.xlu0 %381
        %v383 = vadd.f32 %v337, %v338
        %384 = vadd.xlane.f32.xlu0 %v383
        %v385 = vpop.xlane.xlu0 %384
        %v386 = vadd.f32 %v339, %v340
        %387 = vadd.xlane.f32.xlu0 %v386
        %v388 = vpop.xlane.xlu0 %387
        %v389 = vadd.f32 %v309, %v311
        %v390 = vrot.slane %v389, 4
        %v391 = vadd.f32 %v389, %v390
        %v392 = vrot.slane %v391, 2
        %v393 = vadd.f32 %v391, %v392
        %v394 = vrot.slane %v393, 1
        %v395 = vadd.f32 %v393, %v394
        %v396 = vadd.f32 %v310, %v312
        %v397 = vrot.slane %v396, 4
        %v398 = vadd.f32 %v396, %v397
        %v399 = vrot.slane %v398, 2
        %v400 = vadd.f32 %v398, %v399
        %v401 = vrot.slane %v400, 1
        %v402 = vadd.f32 %v400, %v401
        %v403 = vadd.f32 %v313, %v315
        %v404 = vrot.slane %v403, 4
        %v405 = vadd.f32 %v403, %v404
        %v406 = vrot.slane %v405, 2
        %v407 = vadd.f32 %v405, %v406
        %v408 = vrot.slane %v407, 1
        %v409 = vadd.f32 %v407, %v408
        %v410 = vadd.f32 %v314, %v316
        %v411 = vrot.slane %v410, 4
        %v412 = vadd.f32 %v410, %v411
        %v413 = vrot.slane %v412, 2
        %v414 = vadd.f32 %v412, %v413
        %v415 = vrot.slane %v414, 1
        %v416 = vadd.f32 %v414, %v415
        %v417 = vadd.f32 %v317, %v319
        %v418 = vrot.slane %v417, 4
        %v419 = vadd.f32 %v417, %v418
        %v420 = vrot.slane %v419, 2
        %v421 = vadd.f32 %v419, %v420
        %v422 = vrot.slane %v421, 1
        %v423 = vadd.f32 %v421, %v422
        %v424 = vadd.f32 %v318, %v320
        %v425 = vrot.slane %v424, 4
        %v426 = vadd.f32 %v424, %v425
        %v427 = vrot.slane %v426, 2
        %v428 = vadd.f32 %v426, %v427
        %v429 = vrot.slane %v428, 1
        %v430 = vadd.f32 %v428, %v429
        %v431 = vadd.f32 %v321, %v323
        %v432 = vrot.slane %v431, 4
        %v433 = vadd.f32 %v431, %v432
        %v434 = vrot.slane %v433, 2
        %v435 = vadd.f32 %v433, %v434
        %v436 = vrot.slane %v435, 1
        %v437 = vadd.f32 %v435, %v436
        %v438 = vadd.f32 %v322, %v324
        %v439 = vrot.slane %v438, 4
        %v440 = vadd.f32 %v438, %v439
        %v441 = vrot.slane %v440, 2
        %v442 = vadd.f32 %v440, %v441
        %v443 = vrot.slane %v442, 1
        %v444 = vadd.f32 %v442, %v443
        %v445 = vadd.f32 %v325, %v327
        %v446 = vrot.slane %v445, 4
        %v447 = vadd.f32 %v445, %v446
        %v448 = vrot.slane %v447, 2
        %v449 = vadd.f32 %v447, %v448
        %v450 = vrot.slane %v449, 1
        %v451 = vadd.f32 %v449, %v450
        %v452 = vadd.f32 %v326, %v328
        %v453 = vrot.slane %v452, 4
        %v454 = vadd.f32 %v452, %v453
        %v455 = vrot.slane %v454, 2
        %v456 = vadd.f32 %v454, %v455
        %v457 = vrot.slane %v456, 1
        %v458 = vadd.f32 %v456, %v457
        %v459 = vadd.f32 %v329, %v331
        %v460 = vrot.slane %v459, 4
        %v461 = vadd.f32 %v459, %v460
        %v462 = vrot.slane %v461, 2
        %v463 = vadd.f32 %v461, %v462
        %v464 = vrot.slane %v463, 1
        %v465 = vadd.f32 %v463, %v464
        %v466 = vadd.f32 %v330, %v332
        %v467 = vrot.slane %v466, 4
        %v468 = vadd.f32 %v466, %v467
        %v469 = vrot.slane %v468, 2
        %v470 = vadd.f32 %v468, %v469
        %v471 = vrot.slane %v470, 1
        %v472 = vadd.f32 %v470, %v471
        %v473 = vadd.f32 %v333, %v335
        %v474 = vrot.slane %v473, 4
        %v475 = vadd.f32 %v473, %v474
        %v476 = vrot.slane %v475, 2
        %v477 = vadd.f32 %v475, %v476
        %v478 = vrot.slane %v477, 1
        %v479 = vadd.f32 %v477, %v478
        %v480 = vadd.f32 %v334, %v336
        %v481 = vrot.slane %v480, 4
        %v482 = vadd.f32 %v480, %v481
        %v483 = vrot.slane %v482, 2
        %v484 = vadd.f32 %v482, %v483
        %v485 = vrot.slane %v484, 1
        %v486 = vadd.f32 %v484, %v485
        %v487 = vadd.f32 %v337, %v339
        %v488 = vrot.slane %v487, 4
        %v489 = vadd.f32 %v487, %v488
        %v490 = vrot.slane %v489, 2
        %v491 = vadd.f32 %v489, %v490
        %v492 = vrot.slane %v491, 1
        %v493 = vadd.f32 %v491, %v492
        %v494 = vadd.f32 %v338, %v340
        %v495 = vrot.slane %v494, 4
        %v496 = vadd.f32 %v494, %v495
        %v497 = vrot.slane %v496, 2
        %v498 = vadd.f32 %v496, %v497
        %v499 = vrot.slane %v498, 1
        %v500 = vadd.f32 %v498, %v499
        %s501 = smul.u32 %s32, 8
        %s502 = scalar_lea.vmem [#allocation8], %s501
        %v503 = vld [vmem:[%s502] sm:$0xff]
        %v504 = vld [vmem:[#allocation2] sm:$0x3]
        %506 = vset.pattern.permute.xlu0 9
        %507 = vperm.xlu0 %506, %v503
        %v508 = vpop.permute.xlu0 %507
        %vm526 = vcmask 1041409
        %v527 = vsel %vm526, %v409, %v395
        %vm528 = vcmask 1042434
        %v529 = vsel %vm528, %v423, %v527
        %vm530 = vcmask 1043459
        %v531 = vsel %vm530, %v437, %v529
        %vm532 = vcmask 1044484
        %v533 = vsel %vm532, %v451, %v531
        %vm534 = vcmask 1045509
        %v535 = vsel %vm534, %v465, %v533
        %vm536 = vcmask 1046534
        %v537 = vsel %vm536, %v479, %v535
        %vm538 = vcmask 1047559
        %v539 = vsel %vm538, %v493, %v537
        %v540 = vsel %vm526, %v416, %v402
        %v541 = vsel %vm528, %v430, %v540
        %v542 = vsel %vm530, %v444, %v541
        %v543 = vsel %vm532, %v458, %v542
        %v544 = vsel %vm534, %v472, %v543
        %v545 = vsel %vm536, %v486, %v544
        %v546 = vsel %vm538, %v500, %v545
        %v549 = vmul.f32 %v508, %v539
        %v550 = vmul.f32 %v508, %v546
        %v551 = vrot.slane %v549, 4
        %v552 = vadd.f32 %v549, %v551
        %v553 = vrot.slane %v552, 2
        %v554 = vadd.f32 %v552, %v553
        %v555 = vrot.slane %v554, 1
        %v556 = vadd.f32 %v554, %v555
        %v557 = vrot.slane %v550, 4
        %v558 = vadd.f32 %v550, %v557
        %v559 = vrot.slane %v558, 2
        %v560 = vadd.f32 %v558, %v559
        %v561 = vrot.slane %v560, 1
        %v562 = vadd.f32 %v560, %v561
        %v565 = vcombine.low %v556, %v562
        %v567 = vunpack.c.l.s4 1966171168
        %v568 = vunpack.c.0.s8 %v567
        %v569 = vlaneseq
        %v570 = vshrl.u32 %v569, 7
        %v571 = vsub.s32 %v568, %v570
        %v572 = vrot.slane %v565, %v571
        %v574 = vunpack.c.l.s4 1966171168
        %v575 = vunpack.c.0.s8 %v574
        %v576 = vlaneseq
        %v577 = vshrl.u32 %v576, 7
        %v578 = vsub.s32 %v575, %v577
        %v579 = vrot.slane %v572, %v578
        %v581 = vadd.f32 %v504, %v579
        %v582 = vlaneseq
        %vm583 = vcmp.ge.s32.totalorder %v582, 0
        %vm584 = vcmp.lt.s32.totalorder %v582, 256
        %vm585 = vmand %vm583, %vm584
        %586 = vst.msk [vmem:[#allocation2] sm:$0x3] %vm585, %v581
        %v587 = vld [vmem:[#allocation3] sm:$0x1]
        %588 = vset.pattern.permute.xlu0 10
        %589 = vperm.xlu0 %588, %v503
        %v590 = vpop.permute.xlu0 %589
        %v608 = vlaneseq
        %v609 = vand.u32 %v608, 127
        %v610 = vlaneseq
        %v611 = vshrl.u32 %v610, 7
        %v612 = vsub.s32 %v609, %v611
        %v613 = vrot.slane %v343, %v612
        %v614 = vadd.s32 %v609, 4294967288
        %v615 = vlaneseq
        %v616 = vshrl.u32 %v615, 7
        %v617 = vsub.s32 %v614, %v616
        %v618 = vrot.slane %v346, %v617
        %vm619 = vcmask 130112
        %v620 = vsel %vm619, %v618, %v613
        %v621 = vlaneseq
        %v622 = vshrl.u32 %v621, 7
        %v623 = vsub.s32 %v609, %v622
        %v624 = vrot.slane %v349, %v623
        %v625 = vlaneseq
        %v626 = vshrl.u32 %v625, 7
        %v627 = vsub.s32 %v614, %v626
        %v628 = vrot.slane %v352, %v627
        %v629 = vsel %vm619, %v628, %v624
        %v630 = vlaneseq
        %v631 = vshrl.u32 %v630, 7
        %v632 = vsub.s32 %v609, %v631
        %v633 = vrot.slane %v355, %v632
        %v634 = vlaneseq
        %v635 = vshrl.u32 %v634, 7
        %v636 = vsub.s32 %v614, %v635
        %v637 = vrot.slane %v358, %v636
        %v638 = vsel %vm619, %v637, %v633
        %v639 = vlaneseq
        %v640 = vshrl.u32 %v639, 7
        %v641 = vsub.s32 %v609, %v640
        %v642 = vrot.slane %v361, %v641
        %v643 = vlaneseq
        %v644 = vshrl.u32 %v643, 7
        %v645 = vsub.s32 %v614, %v644
        %v646 = vrot.slane %v364, %v645
        %v647 = vsel %vm619, %v646, %v642
        %v648 = vlaneseq
        %v649 = vshrl.u32 %v648, 7
        %v650 = vsub.s32 %v609, %v649
        %v651 = vrot.slane %v367, %v650
        %v652 = vlaneseq
        %v653 = vshrl.u32 %v652, 7
        %v654 = vsub.s32 %v614, %v653
        %v655 = vrot.slane %v370, %v654
        %v656 = vsel %vm619, %v655, %v651
        %v657 = vlaneseq
        %v658 = vshrl.u32 %v657, 7
        %v659 = vsub.s32 %v609, %v658
        %v660 = vrot.slane %v373, %v659
        %v661 = vlaneseq
        %v662 = vshrl.u32 %v661, 7
        %v663 = vsub.s32 %v614, %v662
        %v664 = vrot.slane %v376, %v663
        %v665 = vsel %vm619, %v664, %v660
        %v666 = vlaneseq
        %v667 = vshrl.u32 %v666, 7
        %v668 = vsub.s32 %v609, %v667
        %v669 = vrot.slane %v379, %v668
        %v670 = vlaneseq
        %v671 = vshrl.u32 %v670, 7
        %v672 = vsub.s32 %v614, %v671
        %v673 = vrot.slane %v382, %v672
        %v674 = vsel %vm619, %v673, %v669
        %v675 = vlaneseq
        %v676 = vshrl.u32 %v675, 7
        %v677 = vsub.s32 %v609, %v676
        %v678 = vrot.slane %v385, %v677
        %v679 = vlaneseq
        %v680 = vshrl.u32 %v679, 7
        %v681 = vsub.s32 %v614, %v680
        %v682 = vrot.slane %v388, %v681
        %v683 = vsel %vm619, %v682, %v678
        %v684 = vsel %vm526, %v629, %v620
        %v685 = vsel %vm528, %v638, %v684
        %v686 = vsel %vm530, %v647, %v685
        %v687 = vsel %vm532, %v656, %v686
        %v688 = vsel %vm534, %v665, %v687
        %v689 = vsel %vm536, %v674, %v688
        %v690 = vsel %vm538, %v683, %v689
        %v692 = vmul.f32 %v590, %v690
        %vm693 = vcmask 130048
        %v694 = vsel %vm693, %v692, 0.0
        %v695 = vrot.slane %v694, 4
        %v696 = vadd.f32 %v694, %v695
        %v697 = vrot.slane %v696, 2
        %v698 = vadd.f32 %v696, %v697
        %v699 = vrot.slane %v698, 1
        %v700 = vadd.f32 %v698, %v699
        %v701 = vadd.f32 %v587, %v700
        %vm702 = vcmask 122880
        %703 = vst.msk [vmem:[#allocation3] sm:$0x1] %vm702, %v701
        %v704 = vsel %vm693, %v690, 0.0
        %705 = vadd.xlane.f32.xlu0 %v704
        %v706 = vpop.xlane.xlu0 %705
        %v707 = vmul.f32 %v706, 0.00024414063
        %s708 = scalar_lea.vmem [#allocation4], %s501
        %vm709 = vcmask 7168
        %710 = vst.msk [vmem:[%s708] sm:$0xff] %vm709, %v707
        %p711 = scmp.eq.s32.totalorder %s32, 1
        // Predicated region
        $region45: #{tpu_custom_call.1} parent=31 // pred_check
          %p712 = pneg %p711
        $region46: #{tpu_custom_call.1} parent=31 // pred_check_branch
          %714 = sbr.rel (%p712) target = $region48
        $region47: #{tpu_custom_call.1} parent=31 // pred_region
          %v715 = vld [vmem:[#allocation8] sm:$0xff]
          %v716 = vld [vmem:[#allocation8 + $0x8] sm:$0xff]
          %v717 = vld [vmem:[%s2] sm:$0x1]
          %v718 = vld [vmem:[#allocation4] sm:$0xff]
          %v719 = vld [vmem:[#allocation4 + $0x8] sm:$0xff]
          %721 = vset.pattern.permute.xlu0 0
          %722 = vperm.xlu0 %721, %v718
          %v723 = vpop.permute.xlu0 %722
          %726 = vset.pattern.permute.xlu0 0
          %727 = vperm.xlu0 %726, %v719
          %v728 = vpop.permute.xlu0 %727
          %v730 = vmul.f32 %v715, %v723
          %v731 = vmul.f32 %v716, %v728
          %vm732 = vcmask 31744
          %v733 = vsel %vm732, %v730, 0.0
          %v734 = vsel %vm732, %v731, 0.0
          %v735 = vadd.f32 %v733, %v734
          %v736 = vrot.slane %v735, 4
          %v737 = vadd.f32 %v735, %v736
          %v738 = vrot.slane %v737, 2
          %v739 = vadd.f32 %v737, %v738
          %v740 = vrot.slane %v739, 1
          %v741 = vadd.f32 %v739, %v740
          %v742 = vadd.f32 %v741, %v717
          %v743 = vmax.f32 %v742, 0.0
          %v744 = vlaneseq
          %v745 = vshrl.u32 %v744, 7
          %v746 = vsub.s32 0, %v745
          %v747 = vrot.slane %v743, %v746
          %749 = vrot.lane.b32.xlu0 %v747, 4
          %v750 = vpop.permute.xlu0 %749
          %v752 = vmul.f32 %v715, %v750
          %v753 = vmul.f32 %v716, %v750
          %756 = vrot.lane.b32.xlu0 %v752, 124
          %v757 = vpop.permute.xlu0 %756
          %758 = vrot.lane.b32.xlu0 %v753, 124
          %v759 = vpop.permute.xlu0 %758
          %v762 = vsel %vm732, %v757, 0.0
          %763 = vadd.xlane.f32.xlu0 %v762
          %v764 = vpop.xlane.xlu0 %763
          %v765 = vsel %vm732, %v759, 0.0
          %766 = vadd.xlane.f32.xlu0 %v765
          %v767 = vpop.xlane.xlu0 %766
          %v768 = vadd.f32 %v764, %v715
          %v769 = vadd.f32 %v767, %v716
          %v770 = vxor.u32 %v768, 2147483648
          %v771 = vxor.u32 %v769, 2147483648
          %v772 = vmul.f32 %v770, 1.442695
          %v773 = vpow.pop %v772
          %v774 = vmul.f32 %v771, 1.442695
          %v775 = vpow.pop %v774
          %v776 = vadd.f32 %v773, 1.0
          %v777 = vadd.f32 %v775, 1.0
          %v778 = vrcp.pop %v776
          %v779 = vmul.f32 1.0, %v778
          %v780 = vrcp.pop %v777
          %v781 = vmul.f32 1.0, %v780
          %v782 = vxor.u32 %v779, 2147483648
          %v783 = vxor.u32 %v781, 2147483648
          %v784 = vmul.f32 %v782, 1.442695
          %v785 = vpow.pop %v784
          %v786 = vmul.f32 %v783, 1.442695
          %v787 = vpow.pop %v786
          %v788 = vadd.f32 %v785, 1.0
          %v789 = vadd.f32 %v787, 1.0
          %v790 = vrcp.pop %v788
          %v791 = vmul.f32 1.0, %v790
          %v792 = vrcp.pop %v789
          %v793 = vmul.f32 1.0, %v792
          %796 = vrot.lane.b32.xlu0 %v791, 120
          %v797 = vpop.permute.xlu0 %796
          %798 = vrot.lane.b32.xlu0 %v793, 120
          %v799 = vpop.permute.xlu0 %798
          %802 = vst.msk [vmem:[%s297] sm:$0xff] %vm709, %v797
          %803 = vst.msk [vmem:[%s297 + $0x8] sm:$0xff] %vm709, %v799
          %v804 = vld [vmem:[#allocation2] sm:$0x3]
          %v805 = vmul.f32 %v804, 0.0625
          %807 = vset.pattern.permute.xlu0 4
          %808 = vperm.xlu0 %807, %v717
          %v809 = vpop.permute.xlu0 %808
          %v811 = vlaneseq
          %v812 = vshrl.u32 %v811, 7
          %v813 = vsub.s32 0, %v812
          %v814 = vrot.slane %v809, %v813
          %v815 = vadd.f32 %v805, %v814
          %v816 = vxor.u32 %v815, 2147483648
          %v817 = vmul.f32 %v816, 1.442695
          %v818 = vpow.pop %v817
          %v819 = vadd.f32 %v818, 1.0
          %v820 = vrcp.pop %v819
          %v821 = vmul.f32 1.0, %v820
          %v822 = vxor.u32 %v821, 2147483648
          %v823 = vmul.f32 %v822, 1.442695
          %v824 = vpow.pop %v823
          %v825 = vadd.f32 %v824, 1.0
          %v826 = vrcp.pop %v825
          %v827 = vmul.f32 1.0, %v826
          %828 = vst.msk [vmem:[%s285] sm:$0x3] %vm585, %v827
          %v829 = vld [vmem:[#allocation3] sm:$0x1]
          %v830 = vmul.f32 %v829, 0.00390625
          %831 = vset.pattern.permute.xlu0 5
          %832 = vperm.xlu0 %831, %v717
          %v833 = vpop.permute.xlu0 %832
          %v835 = vlaneseq
          %v836 = vshrl.u32 %v835, 7
          %v837 = vsub.s32 0, %v836
          %v838 = vrot.slane %v833, %v837
          %v839 = vadd.f32 %v830, %v838
          %v840 = vxor.u32 %v839, 2147483648
          %v841 = vmul.f32 %v840, 1.442695
          %v842 = vpow.pop %v841
          %v843 = vadd.f32 %v842, 1.0
          %v844 = vrcp.pop %v843
          %v845 = vmul.f32 1.0, %v844
          %v846 = vxor.u32 %v845, 2147483648
          %v847 = vmul.f32 %v846, 1.442695
          %v848 = vpow.pop %v847
          %v849 = vadd.f32 %v848, 1.0
          %v850 = vrcp.pop %v849
          %v851 = vmul.f32 1.0, %v850
          %852 = vst.msk [vmem:[%s291] sm:$0x1] %vm702, %v851
        $region48: #{tpu_custom_call.1} parent=31 // pred_fallthru
          _
        %p853 = scmp.lt.s32.totalorder %s31, 1
        %s854 = scalar_select %p853, %s31, 1
        %s855 = smul.addr %s854, 2
        %s856 = smul.addr %s855, 8
        %s857 = scalar_lea.vmem %s3, %s856
        %s858 = sand.u32 %s143, 1
        %s859 = scalar_lea.sflag [#allocation7], %s858
        %s860 = sand.u32 %s143, 1
        %s861 = smul.addr %s860, 2
        %s862 = scalar_lea.vmem [#allocation10], %s861
        %s863 = sand.u32 %s169, 1
        %s864 = scalar_lea.sflag [#allocation12], %s863
        %s865 = sand.u32 %s169, 1
        %s866 = scalar_lea.vmem [#allocation11], %s865
        // Predicated region
        $region49: #{tpu_custom_call.1} parent=31 // pred_check
          %p867 = pneg %p127
        $region50: #{tpu_custom_call.1} parent=31 // pred_check_branch
          %869 = sbr.rel (%p867) target = $region52
        $region51: #{tpu_custom_call.1} parent=31 // pred_region
          _
        $region52: #{tpu_custom_call.1} parent=31 // pred_fallthru
          _
        // Predicated region
        $region53: #{tpu_custom_call.1} parent=31 // pred_check
          %p870 = pneg %p153
        $region54: #{tpu_custom_call.1} parent=31 // pred_check_branch
          %872 = sbr.rel (%p870) target = $region56
        $region55: #{tpu_custom_call.1} parent=31 // pred_region
          %s874 = ssub.s32 32, 32
          %875 = vsyncadd %s859, %s874
          %s876 = smul.addr %s31, 2
          %s877 = smul.addr %s876, 16
          %s878 = scalar_lea.hbm %s4, %s877
          %s880 = sshll.u32 %s862, 4
          %s881 = int_to_ptr.vmem [resolvable:$true] %s880
          %883 = dma.vmem_to_hbm [thread:$0]  %s881, 32, %s878, %s859
        $region56: #{tpu_custom_call.1} parent=31 // pred_fallthru
          _
        // Predicated region
        $region57: #{tpu_custom_call.1} parent=31 // pred_check
          %p884 = pneg %p179
        $region58: #{tpu_custom_call.1} parent=31 // pred_check_branch
          %886 = sbr.rel (%p884) target = $region60
        $region59: #{tpu_custom_call.1} parent=31 // pred_region
          %s888 = ssub.s32 16, 16
          %889 = vsyncadd %s864, %s888
          %s890 = smul.addr %s31, 16
          %s891 = scalar_lea.hbm %s5, %s890
          %s893 = sshll.u32 %s866, 4
          %s894 = int_to_ptr.vmem [resolvable:$true] %s893
          %896 = dma.vmem_to_hbm [thread:$0]  %s894, 16, %s891, %s864
        $region60: #{tpu_custom_call.1} parent=31 // pred_fallthru
          _
      $region32: #{tpu_custom_call.1} parent=5 // pred_fallthru
        _
      %p897 = scmp.le.s32.totalorder 2, %s22
      // Predicated region
      $region61: #{tpu_custom_call.1} parent=5 // pred_check
        %p898 = pneg %p897
      $region62: #{tpu_custom_call.1} parent=5 // pred_check_branch
        %900 = sbr.rel (%p898) target = $region64
      $region63: #{tpu_custom_call.1} parent=5 // pred_region
        %s901 = ssub.s32 %s22, 2
        // Predicated region
        $region65: #{tpu_custom_call.1} parent=63 // pred_check
          %p902 = pneg %p133
        $region66: #{tpu_custom_call.1} parent=63 // pred_check_branch
          %904 = sbr.rel (%p902) target = $region68
        $region67: #{tpu_custom_call.1} parent=63 // pred_region
          %p905 = scmp.lt.s32.totalorder %s33, 1
          %s906 = scalar_select %p905, %s33, 1
          %s907 = smul.addr %s906, 2
          %s908 = smul.addr %s907, 8
          %s909 = scalar_lea.vmem %s3, %s908
        $region68: #{tpu_custom_call.1} parent=63 // pred_fallthru
          _
        // Predicated region
        $region69: #{tpu_custom_call.1} parent=63 // pred_check
          %p910 = pneg %p159
        $region70: #{tpu_custom_call.1} parent=63 // pred_check_branch
          %912 = sbr.rel (%p910) target = $region72
        $region71: #{tpu_custom_call.1} parent=63 // pred_region
          %s913 = sand.u32 %s144, 1
          %s914 = scalar_lea.sflag [#allocation7], %s913
          %s915 = sand.u32 %s144, 1
          %s916 = smul.addr %s915, 2
          %s917 = scalar_lea.vmem [#allocation10], %s916
          %918 = dma.done %s914, 32
        $region72: #{tpu_custom_call.1} parent=63 // pred_fallthru
          _
        // Predicated region
        $region73: #{tpu_custom_call.1} parent=63 // pred_check
          %p919 = pneg %p185
        $region74: #{tpu_custom_call.1} parent=63 // pred_check_branch
          %921 = sbr.rel (%p919) target = $region76
        $region75: #{tpu_custom_call.1} parent=63 // pred_region
          %s922 = sand.u32 %s170, 1
          %s923 = scalar_lea.sflag [#allocation12], %s922
          %s924 = sand.u32 %s170, 1
          %s925 = scalar_lea.vmem [#allocation11], %s924
          %926 = dma.done %s923, 16
        $region76: #{tpu_custom_call.1} parent=63 // pred_fallthru
          _
      $region64: #{tpu_custom_call.1} parent=5 // pred_fallthru
        _
    $region6: #{tpu_custom_call.1} parent=1 // loop_footer
      %s26 = sadd.s32 1, %s22
    $region7: #{tpu_custom_call.1} parent=1 // loop_footer_branch
      %21 = sbr.rel target = $region3
    $region8: #{tpu_custom_call.1} parent=1 // loop_exit
      _
    %927 = vsyncpa [#allocation6], 1
    %s928 = scalar_lea.sflag [#allocation6], 1
    %929 = vsyncpa %s928, 1
    %930 = vsyncpa [#allocation9], 1
    %931 = vsyncpa [#allocation7], 1
    %s932 = scalar_lea.sflag [#allocation7], 1
    %933 = vsyncpa %s932, 1
    %934 = vsyncpa [#allocation12], 1
    %s935 = scalar_lea.sflag [#allocation12], 1
    %936 = vsyncpa %s935, 1

</llo_original>
